<compile_context>
chip_gen: v7x
topology: tpu7x:2x2x1
jax: 0.10.0
libtpu: 0.0.40
codegen_flags: <defaults>
</compile_context>

<pallas_src>
import functools
import math

import jax
import jax.numpy as jnp
from jax import lax
from jax.experimental import pallas as pl
from jax.experimental.pallas import tpu as pltpu

NEG_SLOPE = 0.2


# ---------------------------------------------------------------------------
# Helpers
# ---------------------------------------------------------------------------
def _round_up(x, m):
    return ((x + m - 1) // m) * m


def _largest_divisor(n, cap, align):
    """Largest d <= cap with d % align == 0 and n % d == 0, else None."""
    best = None
    d = align
    limit = min(cap, n)
    while d <= limit:
        if n % d == 0:
            best = d
        d += align
    return best


def _vmem_cap_bytes():
    """Generation-aware VMEM ceiling (leave ~25% headroom for compiler scratch)."""
    try:
        return int(pltpu.get_tpu_info().vmem_capacity_bytes * 3 // 4)
    except Exception:
        return 48 * 1024 * 1024  # safe on v7x (64 MiB physical) and below


def _padded_tile_bytes(rows, cols, itemsize=4):
    # VMEM tiles are physically padded to (8, 128); budget with the padded size.
    return _round_up(max(rows, 1), 8) * _round_up(max(cols, 1), 128) * itemsize


# ---------------------------------------------------------------------------
# Kernel 1: fused  matmul + bias + leaky_relu  (MXU)
# ---------------------------------------------------------------------------
def _matmul_bias_lrelu_kernel(x_ref, w_ref, b_ref, o_ref, acc_ref, *, negative_slope):
    @pl.when(pl.program_id(2) == 0)
    def _init():
        acc_ref[...] = jnp.zeros_like(acc_ref)

    acc_ref[...] += jnp.dot(x_ref[...], w_ref[...],
                            preferred_element_type=jnp.float32)

    @pl.when(pl.program_id(2) == pl.num_programs(2) - 1)
    def _finalize():
        y = acc_ref[...] + b_ref[...]
        y = jnp.where(y >= 0.0, y, y * negative_slope)
        o_ref[...] = y.astype(o_ref.dtype)


def fused_matmul_bias_lrelu(x, w, b, *, negative_slope=NEG_SLOPE,
                            tile_budget=4 * 1024 * 1024):
    """leaky_relu(x @ w + b) with bias + activation fused into the matmul epilogue."""
    M, K = x.shape
    Kw, N = w.shape
    assert K == Kw, (K, Kw)

    # --- tile selection (exact divisors -> no padded copies) -----------------
    tn = N if N <= 512 else (_largest_divisor(N, 512, 128) or N)
    tk = K if K <= 2048 else (_largest_divisor(K, 1024, 128) or K)
    if M <= 8:
        tm = M                                     # full extent (always legal)
    else:
        k_pad = _round_up(tk, 128)
        pref = max(8, min(1024, (tile_budget // (k_pad * 4)) // 8 * 8))
        tm = _largest_divisor(M, pref, 8) or M
    grid = (M // tm, N // tn, K // tk)

    # --- VMEM budget (double-buffered tiles, physical padding included) ------
    needed = (2 * _padded_tile_bytes(tm, tk)
              + 2 * _padded_tile_bytes(tk, tn)
              + 2 * _padded_tile_bytes(tm, tn)
              + 2 * _padded_tile_bytes(1, tn)
              + _padded_tile_bytes(tm, tn)          # f32 accumulator scratch
              + (2 << 20))                          # slack for Mosaic internals
    vmem_limit = int(min(max(needed, 32 << 20), _vmem_cap_bytes()))

    cost = pl.CostEstimate(
        flops=2 * M * K * N + 4 * M * N,
        transcendentals=0,
        bytes_accessed=(M * K + K * N + M * N + N) * 4)

    kernel = functools.partial(_matmul_bias_lrelu_kernel,
                               negative_slope=negative_slope)
    return pl.pallas_call(
        kernel,
        out_shape=jax.ShapeDtypeStruct((M, N), jnp.float32),
        grid_spec=pltpu.PrefetchScalarGridSpec(
            num_scalar_prefetch=0,
            grid=grid,
            in_specs=[
                pl.BlockSpec((tm, tk), lambda i, j, k: (i, k)),
                pl.BlockSpec((tk, tn), lambda i, j, k: (k, j)),
                pl.BlockSpec((1, tn), lambda i, j, k: (0, j)),
            ],
            out_specs=pl.BlockSpec((tm, tn), lambda i, j, k: (i, j)),
            scratch_shapes=[pltpu.VMEM((tm, tn), jnp.float32)],
        ),
        compiler_params=pltpu.CompilerParams(
            dimension_semantics=("parallel", "parallel", "arbitrary"),
            vmem_limit_bytes=vmem_limit),
        cost_estimate=cost,
    )(x.astype(jnp.float32), w.astype(jnp.float32),
      b.reshape(1, N).astype(jnp.float32))


# ---------------------------------------------------------------------------
# Kernel 2: fused  AvgPool2d(2) + leaky_relu  (elementwise, lane-dense layout)
# ---------------------------------------------------------------------------
def _avgpool_lrelu_kernel(a_ref, b_ref, c_ref, d_ref, o_ref, *, negative_slope):
    y = (a_ref[...] + b_ref[...] + c_ref[...] + d_ref[...]) * 0.25
    o_ref[...] = jnp.where(y >= 0.0, y, y * negative_slope)


def avgpool2x2_lrelu(x, *, negative_slope=NEG_SLOPE):
    """x: (N, H, W, C) NHWC -> leaky_relu(avgpool2x2(x)), fused in one kernel."""
    N, H, W, C = x.shape
    Ho, Wo = H // 2, W // 2
    quads = (x[:, 0::2, 0::2, :], x[:, 0::2, 1::2, :],
             x[:, 1::2, 0::2, :], x[:, 1::2, 1::2, :])

    total = N * Ho * Wo * C
    if total % (8 * 128) == 0:
        rows, lanes = total // 128, 128          # lane-dense elementwise layout
    else:
        rows, lanes = N * Ho * Wo, C
    quads = tuple(q.reshape(rows, lanes).astype(jnp.float32) for q in quads)

    rb = _largest_divisor(rows, 1024, 8) or rows
    grid = (rows // rb,)

    needed = 5 * 2 * _padded_tile_bytes(rb, lanes) + (2 << 20)
    vmem_limit = int(min(max(needed, 32 << 20), _vmem_cap_bytes()))
    cost = pl.CostEstimate(flops=5 * rows * lanes, transcendentals=0,
                           bytes_accessed=5 * rows * lanes * 4)

    out = pl.pallas_call(
        functools.partial(_avgpool_lrelu_kernel, negative_slope=negative_slope),
        out_shape=jax.ShapeDtypeStruct((rows, lanes), jnp.float32),
        grid_spec=pltpu.PrefetchScalarGridSpec(
            num_scalar_prefetch=0,
            grid=grid,
            in_specs=[pl.BlockSpec((rb, lanes), lambda i: (i, 0))] * 4,
            out_specs=pl.BlockSpec((rb, lanes), lambda i: (i, 0)),
        ),
        compiler_params=pltpu.CompilerParams(
            dimension_semantics=("parallel",),
            vmem_limit_bytes=vmem_limit),
        cost_estimate=cost,
    )(*quads)
    return out.reshape(N, Ho, Wo, C)


# ---------------------------------------------------------------------------
# Layer wrappers (patch extraction stays in XLA; the GEMM + bias + act is Pallas)
# ---------------------------------------------------------------------------
def _im2col_3x3(x):
    N, H, W, C = x.shape
    xp = jnp.pad(x, ((0, 0), (1, 1), (1, 1), (0, 0)))
    cols = [xp[:, dy:dy + H, dx:dx + W, :] for dy in range(3) for dx in range(3)]
    return jnp.concatenate(cols, axis=-1).reshape(N * H * W, 9 * C)


def _space_to_depth_2x2(x):
    N, H, W, C = x.shape
    x = x.reshape(N, H // 2, 2, W // 2, 2, C)
    x = jnp.transpose(x, (0, 1, 3, 2, 4, 5))
    return x.reshape(N * (H // 2) * (W // 2), 4 * C)


def conv1x1_lrelu(x, w, b):
    N, H, W, Cin = x.shape
    Cout = w.shape[-1]
    y = fused_matmul_bias_lrelu(x.reshape(N * H * W, Cin), w.reshape(Cin, Cout), b)
    return y.reshape(N, H, W, Cout)


def conv3x3_lrelu(x, w, b):
    N, H, W, Cin = x.shape
    Cout = w.shape[-1]
    y = fused_matmul_bias_lrelu(_im2col_3x3(x), w.reshape(9 * Cin, Cout), b)
    return y.reshape(N, H, W, Cout)


def conv2x2s2_lrelu(x, w, b):
    N, H, W, Cin = x.shape
    Cout = w.shape[-1]
    y = fused_matmul_bias_lrelu(_space_to_depth_2x2(x), w.reshape(4 * Cin, Cout), b)
    return y.reshape(N, H // 2, W // 2, Cout)


def linear_lrelu(x, w, b):
    return fused_matmul_bias_lrelu(x, w, b)


# ---------------------------------------------------------------------------
# Parameters + forward (matches StyleDiscriminator, structure='fixed', f=None)
# ---------------------------------------------------------------------------
def init_params(key, *, resolution=512, fmap_base=512, num_channels=3,
                fmap_max=128, fmap_decay=1.0):
    rlog2 = int(math.log2(resolution))
    assert resolution == 2 ** rlog2 and resolution >= 4
    nf = lambda s: min(int(fmap_base / (2.0 ** (s * fmap_decay))), fmap_max)
    keys = iter(jax.random.split(key, 64))

    def conv_p(kh, kw, cin, cout):
        w = jax.random.normal(next(keys), (kh, kw, cin, cout), jnp.float32)
        w = w * math.sqrt(2.0 / (kh * kw * cin))
        bias = jax.random.normal(next(keys), (cout,), jnp.float32) * 0.1
        return w, bias

    def lin_p(cin, cout):
        w = jax.random.normal(next(keys), (cin, cout), jnp.float32)
        w = w * math.sqrt(2.0 / cin)
        bias = jax.random.normal(next(keys), (cout,), jnp.float32) * 0.1
        return w, bias

    p = {}
    p["fromrgb"] = conv_p(1, 1, num_channels, nf(rlog2 - 1))
    p["conv1"] = conv_p(3, 3, nf(rlog2 - 1), nf(rlog2 - 1))
    p["conv2"] = conv_p(3, 3, nf(rlog2 - 1), nf(rlog2 - 2))
    p["conv3"] = conv_p(3, 3, nf(rlog2 - 2), nf(rlog2 - 3))
    p["conv4"] = conv_p(3, 3, nf(rlog2 - 3), nf(rlog2 - 4))
    p["conv5"] = conv_p(3, 3, nf(rlog2 - 4), nf(rlog2 - 5))
    p["conv6"] = conv_p(3, 3, nf(rlog2 - 5), nf(rlog2 - 6))
    p["conv7"] = conv_p(3, 3, nf(rlog2 - 6), nf(rlog2 - 7))
    p["conv8"] = conv_p(3, 3, nf(rlog2 - 7), nf(rlog2 - 8))
    p["conv_last"] = conv_p(3, 3, nf(rlog2 - 8), nf(1))
    p["down21"] = conv_p(2, 2, nf(rlog2 - 5), nf(rlog2 - 5))
    p["down22"] = conv_p(2, 2, nf(rlog2 - 6), nf(rlog2 - 6))
    p["down23"] = conv_p(2, 2, nf(rlog2 - 7), nf(rlog2 - 7))
    p["down24"] = conv_p(2, 2, nf(rlog2 - 8), nf(rlog2 - 8))
    p["dense0"] = lin_p(fmap_base, nf(0))
    p["dense1"] = lin_p(nf(0), 1)
    return p


def style_discriminator_forward(params, x_nchw):
    x = jnp.transpose(x_nchw, (0, 2, 3, 1)).astype(jnp.float32)   # NHWC
    x = conv1x1_lrelu(x, *params["fromrgb"])
    x = conv3x3_lrelu(x, *params["conv1"])
    x = avgpool2x2_lrelu(x)                 # blur2d(f=None) is the identity
    x = conv3x3_lrelu(x, *params["conv2"])
    x = avgpool2x2_lrelu(x)
    x = conv3x3_lrelu(x, *params["conv3"])
    x = avgpool2x2_lrelu(x)
    x = conv3x3_lrelu(x, *params["conv4"])
    x = avgpool2x2_lrelu(x)
    x = conv3x3_lrelu(x, *params["conv5"])
    x = conv2x2s2_lrelu(x, *params["down21"])
    x = conv3x3_lrelu(x, *params["conv6"])
    x = conv2x2s2_lrelu(x, *params["down22"])
    x = conv3x3_lrelu(x, *params["conv7"])
    x = conv2x2s2_lrelu(x, *params["down23"])
    x = conv3x3_lrelu(x, *params["conv8"])
    x = conv2x2s2_lrelu(x, *params["down24"])
    x = conv3x3_lrelu(x, *params["conv_last"])
    n = x.shape[0]
    x = jnp.transpose(x, (0, 3, 1, 2)).reshape(n, -1)  # PyTorch NCHW .view(n, -1) order
    x = linear_lrelu(x, *params["dense0"])
    x = linear_lrelu(x, *params["dense1"])
    return x


# ---------------------------------------------------------------------------
# Pure-JAX (XLA) reference with identical semantics, for verification
# ---------------------------------------------------------------------------
def style_discriminator_reference(params, x_nchw):
    lrelu = lambda t: jnp.where(t >= 0.0, t, NEG_SLOPE * t)

    def conv(x, wb, stride=1, padding="VALID"):
        w, bias = wb
        y = lax.conv_general_dilated(
            x, w, (stride, stride), padding,
            dimension_numbers=("NHWC", "HWIO", "NHWC"),
            precision=lax.Precision.HIGHEST)
        return y + bias

    def pool(x):
        n, h, w, c = x.shape
        return x.reshape(n, h // 2, 2, w // 2, 2, c).mean(axis=(2, 4))

    same = [(1, 1), (1, 1)]
    x = jnp.transpose(x_nchw, (0, 2, 3, 1)).astype(jnp.float32)
    x = lrelu(conv(x, params["fromrgb"]))
    x = lrelu(conv(x, params["conv1"], padding=same))
    x = lrelu(pool(x))
    x = lrelu(conv(x, params["conv2"], padding=same))
    x = lrelu(pool(x))
    x = lrelu(conv(x, params["conv3"], padding=same))
    x = lrelu(pool(x))
    x = lrelu(conv(x, params["conv4"], padding=same))
    x = lrelu(pool(x))
    x = lrelu(conv(x, params["conv5"], padding=same))
    x = lrelu(conv(x, params["down21"], stride=2))
    x = lrelu(conv(x, params["conv6"], padding=same))
    x = lrelu(conv(x, params["down22"], stride=2))
    x = lrelu(conv(x, params["conv7"], padding=same))
    x = lrelu(conv(x, params["down23"], stride=2))
    x = lrelu(conv(x, params["conv8"], padding=same))
    x = lrelu(conv(x, params["down24"], stride=2))
    x = lrelu(conv(x, params["conv_last"], padding=same))
    n = x.shape[0]
    x = jnp.transpose(x, (0, 3, 1, 2)).reshape(n, -1)
    x = lrelu(jnp.dot(x, params["dense0"][0], precision=lax.Precision.HIGHEST)
              + params["dense0"][1])
    x = lrelu(jnp.dot(x, params["dense1"][0], precision=lax.Precision.HIGHEST)
              + params["dense1"][1])
    return x


# ---------------------------------------------------------------------------
if __name__ == "__main__":
    key = jax.random.PRNGKey(0)
    kp, kx, k1, k2, k3, k4 = jax.random.split(key, 6)

    # --- unit check: fused matmul + bias + leaky_relu kernel ----------------
    a = jax.random.normal(k1, (256, 18), jnp.float32)
    wu = jax.random.normal(k2, (18, 4), jnp.float32) * 0.1
    bu = jax.random.normal(k3, (4,), jnp.float32) * 0.1
    got = jax.block_until_ready(fused_matmul_bias_lrelu(a, wu, bu))
    want = jnp.dot(a, wu, precision=lax.Precision.HIGHEST) + bu
    want = jnp.where(want >= 0.0, want, NEG_SLOPE * want)
    assert jnp.allclose(got, want, atol=1e-4, rtol=1e-4), "matmul kernel mismatch"

    # --- unit check: fused avgpool + leaky_relu kernel -----------------------
    xp_t = jax.random.normal(k4, (2, 8, 8, 4), jnp.float32)
    got_p = jax.block_until_ready(avgpool2x2_lrelu(xp_t))
    ref_p = xp_t.reshape(2, 4, 2, 4, 2, 4).mean(axis=(2, 4))
    ref_p = jnp.where(ref_p >= 0.0, ref_p, NEG_SLOPE * ref_p)
    assert jnp.allclose(got_p, ref_p, atol=1e-5, rtol=1e-5), "avgpool kernel mismatch"

    # --- end-to-end StyleDiscriminator forward ------------------------------
    # TODO(synk): 512x512 is the smallest input the reference forward supports (8 hard-coded
    # downsampling stages and dense0.in_features == fmap_base); channel widths are kept small
    # (fmap_base=512, fmap_max=128) so the test stays light.
    resolution, fmap_base, fmap_max, num_channels = 512, 512, 128, 3
    params = init_params(kp, resolution=resolution, fmap_base=fmap_base,
                         num_channels=num_channels, fmap_max=fmap_max)
    x = jax.random.normal(kx, (2, num_channels, resolution, resolution), jnp.float32)

    fwd = jax.jit(style_discriminator_forward)
    ref_fn = jax.jit(style_discriminator_reference)
    out = jax.block_until_ready(fwd(params, x))
    ref = jax.block_until_ready(ref_fn(params, x))

    assert out.shape == (2, 1), out.shape
    assert bool(jnp.all(jnp.isfinite(out))), "non-finite output"
    assert jnp.allclose(out, ref, atol=1e-2, rtol=1e-2), (
        f"forward mismatch: pallas={out.tolist()} ref={ref.tolist()}")
    print("KERNEL_OK")
</pallas_src>

<mosaic_0001>
module attributes {stable_mosaic.version = 11 : i64} {
  func.func @_matmul_bias_lrelu_kernel(%arg0: i32, %arg1: i32, %arg2: i32, %arg3: memref<256x18xf32, #tpu.memory_space<vmem>>, %arg4: memref<18x4xf32, #tpu.memory_space<vmem>>, %arg5: memref<1x4xf32, #tpu.memory_space<vmem>>, %arg6: memref<256x4xf32, #tpu.memory_space<vmem>>, %arg7: memref<256x4xf32, #tpu.memory_space<vmem>>) attributes {dimension_semantics = [#tpu.dimension_semantics<parallel>, #tpu.dimension_semantics<parallel>, #tpu.dimension_semantics<arbitrary>], iteration_bounds = array<i64: 1, 1, 1>, scalar_prefetch = 0 : i64, scratch_operands = 1 : i64, tpu.core_type = #tpu.core_type<tc>, window_params = [{transform_indices = @transform_0, window_bounds = array<i64: 256, 18>}, {transform_indices = @transform_1, window_bounds = array<i64: 18, 4>}, {transform_indices = @transform_2, window_bounds = array<i64: 1, 4>}, {transform_indices = @transform_3, window_bounds = array<i64: 256, 4>}]} {
    %c0_i32 = arith.constant 0 : i32
    %0 = arith.cmpi eq, %arg2, %c0_i32 : i32
    %1 = arith.extui %0 : i1 to i32
    %c0_i32_0 = arith.constant 0 : i32
    %2 = arith.cmpi ne, %1, %c0_i32_0 : i32
    scf.if %2 {
      %cst_10 = arith.constant 0.000000e+00 : f32
      %12 = vector.broadcast %cst_10 : f32 to vector<256x4xf32>
      %c0_11 = arith.constant 0 : index
      %c0_12 = arith.constant 0 : index
      %13 = vector.load %arg7[%c0_11, %c0_12] : memref<256x4xf32, #tpu.memory_space<vmem>>, vector<256x4xf32>
      tpu.vector_store %arg7[%c0_11, %c0_12], %12 {strides = array<i32>} : memref<256x4xf32, #tpu.memory_space<vmem>>, vector<256x4xf32>,
    } else {
    }
    %c0 = arith.constant 0 : index
    %c0_1 = arith.constant 0 : index
    %3 = vector.load %arg7[%c0, %c0_1] : memref<256x4xf32, #tpu.memory_space<vmem>>, vector<256x4xf32>
    %c0_2 = arith.constant 0 : index
    %c0_3 = arith.constant 0 : index
    %4 = vector.load %arg3[%c0_2, %c0_3] : memref<256x18xf32, #tpu.memory_space<vmem>>, vector<256x18xf32>
    %c0_4 = arith.constant 0 : index
    %c0_5 = arith.constant 0 : index
    %5 = vector.load %arg4[%c0_4, %c0_5] : memref<18x4xf32, #tpu.memory_space<vmem>>, vector<18x4xf32>
    %cst = arith.constant dense<0.000000e+00> : vector<256x4xf32>
    %6 = tpu.matmul %4, %5, %cst {dimension_numbers = #tpu.dot_dimension_numbers<[1], [0], [0], [1], [0, 0, 1, 1], [], []>} : vector<256x18xf32>, vector<18x4xf32>, vector<256x4xf32> -> vector<256x4xf32>
    %7 = arith.addf %3, %6 : vector<256x4xf32>
    %c0_6 = arith.constant 0 : index
    %c0_7 = arith.constant 0 : index
    %8 = vector.load %arg7[%c0_6, %c0_7] : memref<256x4xf32, #tpu.memory_space<vmem>>, vector<256x4xf32>
    tpu.vector_store %arg7[%c0_6, %c0_7], %7 {strides = array<i32>} : memref<256x4xf32, #tpu.memory_space<vmem>>, vector<256x4xf32>,
    %c0_i32_8 = arith.constant 0 : i32
    %9 = arith.cmpi eq, %arg2, %c0_i32_8 : i32
    %10 = arith.extui %9 : i1 to i32
    %c0_i32_9 = arith.constant 0 : i32
    %11 = arith.cmpi ne, %10, %c0_i32_9 : i32
    scf.if %11 {
      %c0_10 = arith.constant 0 : index
      %c0_11 = arith.constant 0 : index
      %12 = vector.load %arg7[%c0_10, %c0_11] : memref<256x4xf32, #tpu.memory_space<vmem>>, vector<256x4xf32>
      %c0_12 = arith.constant 0 : index
      %c0_13 = arith.constant 0 : index
      %13 = vector.load %arg5[%c0_12, %c0_13] : memref<1x4xf32, #tpu.memory_space<vmem>>, vector<1x4xf32>
      %14 = vector.broadcast %13 : vector<1x4xf32> to vector<256x4xf32>
      %15 = arith.addf %12, %14 : vector<256x4xf32>
      %cst_14 = arith.constant 0.000000e+00 : f32
      %16 = vector.broadcast %cst_14 : f32 to vector<256x4xf32>
      %17 = arith.cmpf oge, %15, %16 : vector<256x4xf32>
      %cst_15 = arith.constant 2.000000e-01 : f32
      %18 = vector.broadcast %cst_15 : f32 to vector<256x4xf32>
      %19 = arith.mulf %15, %18 : vector<256x4xf32>
      %20 = arith.select %17, %15, %19 : vector<256x4xi1>, vector<256x4xf32>
      %c0_16 = arith.constant 0 : index
      %c0_17 = arith.constant 0 : index
      %21 = vector.load %arg6[%c0_16, %c0_17] : memref<256x4xf32, #tpu.memory_space<vmem>>, vector<256x4xf32>
      tpu.vector_store %arg6[%c0_16, %c0_17], %20 {strides = array<i32>} : memref<256x4xf32, #tpu.memory_space<vmem>>, vector<256x4xf32>,
    } else {
    }
    return
  }
  func.func @transform_0(%arg0: i32, %arg1: i32, %arg2: i32) -> (i32, i32) {
    %c0_i32 = arith.constant 0 : i32
    return %arg0, %arg2 : i32, i32
  }
  func.func @transform_1(%arg0: i32, %arg1: i32, %arg2: i32) -> (i32, i32) {
    %c0_i32 = arith.constant 0 : i32
    return %arg2, %arg1 : i32, i32
  }
  func.func @transform_2(%arg0: i32, %arg1: i32, %arg2: i32) -> (i32, i32) {
    %c0_i32 = arith.constant 0 : i32
    %c0_i32_0 = arith.constant 0 : i32
    return %c0_i32, %arg1 : i32, i32
  }
  func.func @transform_3(%arg0: i32, %arg1: i32, %arg2: i32) -> (i32, i32) {
    %c0_i32 = arith.constant 0 : i32
    return %arg0, %arg1 : i32, i32
  }
}

</mosaic_0001>

<llo_original>
// kernel: tpu_custom_call.1
$region0: #{tpu_custom_call.1}
  #allocation0 [shape = 'u32[]', space=smem, size = 0x4, offset = 0x4, fixed_abs, tag = 'smem constant byte address 0x4 - core index']
  #allocation1 [shape = 'u32[144,128]{1,0:T(1,128)}', space=vmem, size = 0x12000, scoped, tag = 'internal scratch']
  #allocation2 [shape = 'f32[256,4]{1,0:T(8,128)}', space=vmem, size = 0x20000, scoped, tag = 'scratch operand']
  %s0 = inlined_call_operand.vmem [shape: f32[256,18], index: 0, kind: input, shape index: {}]
  %s1 = inlined_call_operand.vmem [shape: f32[18,4], index: 1, kind: input, shape index: {}]
  %s2 = inlined_call_operand.vmem [shape: f32[1,4], index: 2, kind: input, shape index: {}]
  %s3 = inlined_call_operand.vmem [shape: f32[256,4], index: 3, kind: output, shape index: {}]
  %s4 = sld [smem:[#allocation0]]
  $region30: #{tpu_custom_call.1} parent=0
    _
  %s6 = ssub.s32 1, %s4
  %s7 = scalar_select 0, %s6, %s4
  // Predicated region
  $region2: #{tpu_custom_call.1} parent=0 // pred_check
    _
  $region3: #{tpu_custom_call.1} parent=0 // pred_check_branch
    %9 = sbr.rel (0) target = $region5
  $region4: #{tpu_custom_call.1} parent=0 // pred_region
    _
  $region5: #{tpu_custom_call.1} parent=0 // pred_fallthru
    _
  // Predicated region
  $region6: #{tpu_custom_call.1} parent=0 // pred_check
    _
  $region7: #{tpu_custom_call.1} parent=0 // pred_check_branch
    %11 = sbr.rel (0) target = $region9
  $region8: #{tpu_custom_call.1} parent=0 // pred_region
    _
  $region9: #{tpu_custom_call.1} parent=0 // pred_fallthru
    _
  // Predicated region
  $region10: #{tpu_custom_call.1} parent=0 // pred_check
    _
  $region11: #{tpu_custom_call.1} parent=0 // pred_check_branch
    %13 = sbr.rel (0) target = $region13
  $region12: #{tpu_custom_call.1} parent=0 // pred_region
    _
  $region13: #{tpu_custom_call.1} parent=0 // pred_fallthru
    _
  %p14 = scmp.eq.s32.totalorder 0, 0
  // Predicated region
  $region14: #{tpu_custom_call.1} parent=0 // pred_check
    %p15 = pneg %p14
  $region15: #{tpu_custom_call.1} parent=0 // pred_check_branch
    %17 = sbr.rel (%p15) target = $region17
  $region16: #{tpu_custom_call.1} parent=0 // pred_region
    %vm18 = vcmask 31744
    %19 = vst.msk [vmem:[#allocation2] sm:$0xff] %vm18, 0.0
    %20 = vst.msk [vmem:[#allocation2 + $0x8] sm:$0xff] %vm18, 0.0
    %21 = vst.msk [vmem:[#allocation2 + $0x10] sm:$0xff] %vm18, 0.0
    %22 = vst.msk [vmem:[#allocation2 + $0x18] sm:$0xff] %vm18, 0.0
    %23 = vst.msk [vmem:[#allocation2 + $0x20] sm:$0xff] %vm18, 0.0
    %24 = vst.msk [vmem:[#allocation2 + $0x28] sm:$0xff] %vm18, 0.0
    %25 = vst.msk [vmem:[#allocation2 + $0x30] sm:$0xff] %vm18, 0.0
    %26 = vst.msk [vmem:[#allocation2 + $0x38] sm:$0xff] %vm18, 0.0
    %27 = vst.msk [vmem:[#allocation2 + $0x40] sm:$0xff] %vm18, 0.0
    %28 = vst.msk [vmem:[#allocation2 + $0x48] sm:$0xff] %vm18, 0.0
    %29 = vst.msk [vmem:[#allocation2 + $0x50] sm:$0xff] %vm18, 0.0
    %30 = vst.msk [vmem:[#allocation2 + $0x58] sm:$0xff] %vm18, 0.0
    %31 = vst.msk [vmem:[#allocation2 + $0x60] sm:$0xff] %vm18, 0.0
    %32 = vst.msk [vmem:[#allocation2 + $0x68] sm:$0xff] %vm18, 0.0
    %33 = vst.msk [vmem:[#allocation2 + $0x70] sm:$0xff] %vm18, 0.0
    %34 = vst.msk [vmem:[#allocation2 + $0x78] sm:$0xff] %vm18, 0.0
    %35 = vst.msk [vmem:[#allocation2 + $0x80] sm:$0xff] %vm18, 0.0
    %36 = vst.msk [vmem:[#allocation2 + $0x88] sm:$0xff] %vm18, 0.0
    %37 = vst.msk [vmem:[#allocation2 + $0x90] sm:$0xff] %vm18, 0.0
    %38 = vst.msk [vmem:[#allocation2 + $0x98] sm:$0xff] %vm18, 0.0
    %39 = vst.msk [vmem:[#allocation2 + $0xa0] sm:$0xff] %vm18, 0.0
    %40 = vst.msk [vmem:[#allocation2 + $0xa8] sm:$0xff] %vm18, 0.0
    %41 = vst.msk [vmem:[#allocation2 + $0xb0] sm:$0xff] %vm18, 0.0
    %42 = vst.msk [vmem:[#allocation2 + $0xb8] sm:$0xff] %vm18, 0.0
    %43 = vst.msk [vmem:[#allocation2 + $0xc0] sm:$0xff] %vm18, 0.0
    %44 = vst.msk [vmem:[#allocation2 + $0xc8] sm:$0xff] %vm18, 0.0
    %45 = vst.msk [vmem:[#allocation2 + $0xd0] sm:$0xff] %vm18, 0.0
    %46 = vst.msk [vmem:[#allocation2 + $0xd8] sm:$0xff] %vm18, 0.0
    %47 = vst.msk [vmem:[#allocation2 + $0xe0] sm:$0xff] %vm18, 0.0
    %48 = vst.msk [vmem:[#allocation2 + $0xe8] sm:$0xff] %vm18, 0.0
    %49 = vst.msk [vmem:[#allocation2 + $0xf0] sm:$0xff] %vm18, 0.0
    %50 = vst.msk [vmem:[#allocation2 + $0xf8] sm:$0xff] %vm18, 0.0
  $region17: #{tpu_custom_call.1} parent=0 // pred_fallthru
    _
  %v51 = vld [vmem:[#allocation2] sm:$0xff]
  %v52 = vld [vmem:[#allocation2 + $0x8] sm:$0xff]
  %v53 = vld [vmem:[#allocation2 + $0x10] sm:$0xff]
  %v54 = vld [vmem:[#allocation2 + $0x18] sm:$0xff]
  %v55 = vld [vmem:[#allocation2 + $0x20] sm:$0xff]
  %v56 = vld [vmem:[#allocation2 + $0x28] sm:$0xff]
  %v57 = vld [vmem:[#allocation2 + $0x30] sm:$0xff]
  %v58 = vld [vmem:[#allocation2 + $0x38] sm:$0xff]
  %v59 = vld [vmem:[#allocation2 + $0x40] sm:$0xff]
  %v60 = vld [vmem:[#allocation2 + $0x48] sm:$0xff]
  %v61 = vld [vmem:[#allocation2 + $0x50] sm:$0xff]
  %v62 = vld [vmem:[#allocation2 + $0x58] sm:$0xff]
  %v63 = vld [vmem:[#allocation2 + $0x60] sm:$0xff]
  %v64 = vld [vmem:[#allocation2 + $0x68] sm:$0xff]
  %v65 = vld [vmem:[#allocation2 + $0x70] sm:$0xff]
  %v66 = vld [vmem:[#allocation2 + $0x78] sm:$0xff]
  %v67 = vld [vmem:[#allocation2 + $0x80] sm:$0xff]
  %v68 = vld [vmem:[#allocation2 + $0x88] sm:$0xff]
  %v69 = vld [vmem:[#allocation2 + $0x90] sm:$0xff]
  %v70 = vld [vmem:[#allocation2 + $0x98] sm:$0xff]
  %v71 = vld [vmem:[#allocation2 + $0xa0] sm:$0xff]
  %v72 = vld [vmem:[#allocation2 + $0xa8] sm:$0xff]
  %v73 = vld [vmem:[#allocation2 + $0xb0] sm:$0xff]
  %v74 = vld [vmem:[#allocation2 + $0xb8] sm:$0xff]
  %v75 = vld [vmem:[#allocation2 + $0xc0] sm:$0xff]
  %v76 = vld [vmem:[#allocation2 + $0xc8] sm:$0xff]
  %v77 = vld [vmem:[#allocation2 + $0xd0] sm:$0xff]
  %v78 = vld [vmem:[#allocation2 + $0xd8] sm:$0xff]
  %v79 = vld [vmem:[#allocation2 + $0xe0] sm:$0xff]
  %v80 = vld [vmem:[#allocation2 + $0xe8] sm:$0xff]
  %v81 = vld [vmem:[#allocation2 + $0xf0] sm:$0xff]
  %v82 = vld [vmem:[#allocation2 + $0xf8] sm:$0xff]
  %v83 = vld [vmem:[%s0] sm:$0xff]
  %v84 = vld [vmem:[%s0 + $0x8] sm:$0xff]
  %v85 = vld [vmem:[%s0 + $0x10] sm:$0xff]
  %v86 = vld [vmem:[%s0 + $0x18] sm:$0xff]
  %v87 = vld [vmem:[%s0 + $0x20] sm:$0xff]
  %v88 = vld [vmem:[%s0 + $0x28] sm:$0xff]
  %v89 = vld [vmem:[%s0 + $0x30] sm:$0xff]
  %v90 = vld [vmem:[%s0 + $0x38] sm:$0xff]
  %v91 = vld [vmem:[%s0 + $0x40] sm:$0xff]
  %v92 = vld [vmem:[%s0 + $0x48] sm:$0xff]
  %v93 = vld [vmem:[%s0 + $0x50] sm:$0xff]
  %v94 = vld [vmem:[%s0 + $0x58] sm:$0xff]
  %v95 = vld [vmem:[%s0 + $0x60] sm:$0xff]
  %v96 = vld [vmem:[%s0 + $0x68] sm:$0xff]
  %v97 = vld [vmem:[%s0 + $0x70] sm:$0xff]
  %v98 = vld [vmem:[%s0 + $0x78] sm:$0xff]
  %v99 = vld [vmem:[%s0 + $0x80] sm:$0xff]
  %v100 = vld [vmem:[%s0 + $0x88] sm:$0xff]
  %v101 = vld [vmem:[%s0 + $0x90] sm:$0xff]
  %v102 = vld [vmem:[%s0 + $0x98] sm:$0xff]
  %v103 = vld [vmem:[%s0 + $0xa0] sm:$0xff]
  %v104 = vld [vmem:[%s0 + $0xa8] sm:$0xff]
  %v105 = vld [vmem:[%s0 + $0xb0] sm:$0xff]
  %v106 = vld [vmem:[%s0 + $0xb8] sm:$0xff]
  %v107 = vld [vmem:[%s0 + $0xc0] sm:$0xff]
  %v108 = vld [vmem:[%s0 + $0xc8] sm:$0xff]
  %v109 = vld [vmem:[%s0 + $0xd0] sm:$0xff]
  %v110 = vld [vmem:[%s0 + $0xd8] sm:$0xff]
  %v111 = vld [vmem:[%s0 + $0xe0] sm:$0xff]
  %v112 = vld [vmem:[%s0 + $0xe8] sm:$0xff]
  %v113 = vld [vmem:[%s0 + $0xf0] sm:$0xff]
  %v114 = vld [vmem:[%s0 + $0xf8] sm:$0xff]
  %v115 = vld [vmem:[%s1] sm:$0xff]
  %v116 = vld [vmem:[%s1 + $0x8] sm:$0xff]
  %v117 = vld [vmem:[%s1 + $0x10] sm:$0x3]
  %vm118 = vcmask 146432
  %v120 = vsel %vm118, %v83, 0
  %v123 = vsel %vm118, %v84, 0
  %v126 = vsel %vm118, %v85, 0
  %v129 = vsel %vm118, %v86, 0
  %v132 = vsel %vm118, %v87, 0
  %v135 = vsel %vm118, %v88, 0
  %v138 = vsel %vm118, %v89, 0
  %v141 = vsel %vm118, %v90, 0
  %v144 = vsel %vm118, %v91, 0
  %v147 = vsel %vm118, %v92, 0
  %v150 = vsel %vm118, %v93, 0
  %v153 = vsel %vm118, %v94, 0
  %v156 = vsel %vm118, %v95, 0
  %v159 = vsel %vm118, %v96, 0
  %v162 = vsel %vm118, %v97, 0
  %v165 = vsel %vm118, %v98, 0
  %v168 = vsel %vm118, %v99, 0
  %v171 = vsel %vm118, %v100, 0
  %v174 = vsel %vm118, %v101, 0
  %v177 = vsel %vm118, %v102, 0
  %v180 = vsel %vm118, %v103, 0
  %v183 = vsel %vm118, %v104, 0
  %v186 = vsel %vm118, %v105, 0
  %v189 = vsel %vm118, %v106, 0
  %v192 = vsel %vm118, %v107, 0
  %v195 = vsel %vm118, %v108, 0
  %v198 = vsel %vm118, %v109, 0
  %v201 = vsel %vm118, %v110, 0
  %v204 = vsel %vm118, %v111, 0
  %v207 = vsel %vm118, %v112, 0
  %v210 = vsel %vm118, %v113, 0
  %v213 = vsel %vm118, %v114, 0
  %vm215 = vcmask 1041408
  %v217 = vsel %vm215, %v117, 0
  %219 = vmatprep.subr.mxu0 0.0
  %220 = vmatpush1.msra.mxu0 %v115
  %221 = vmatprep.subr.mxu0 0.0
  %222 = vmatpush1.msra.mxu0 %v116
  %223 = vmatprep.subr.mxu0 0.0
  %224 = vmatpush1.msra.mxu0 %v217
  %225 = vmatprep.subr.mxu0 0.0
  %226 = vmatpush1.msra.mxu0 0.0
  %227 = vmatprep.subr.mxu0 0.0
  %228 = vmatpush1.msra.mxu0 0.0
  %229 = vmatprep.subr.mxu0 0.0
  %230 = vmatpush1.msra.mxu0 0.0
  %231 = vmatprep.subr.mxu0 0.0
  %232 = vmatpush1.msra.mxu0 0.0
  %233 = vmatprep.subr.mxu0 0.0
  %234 = vmatpush1.msra.mxu0 0.0
  %235 = vmatprep.subr.mxu0 0.0
  %236 = vmatpush1.msra.mxu0 0.0
  %237 = vmatprep.subr.mxu0 0.0
  %238 = vmatpush1.msra.mxu0 0.0
  %239 = vmatprep.subr.mxu0 0.0
  %240 = vmatpush1.msra.mxu0 0.0
  %241 = vmatprep.subr.mxu0 0.0
  %242 = vmatpush1.msra.mxu0 0.0
  %243 = vmatprep.subr.mxu0 0.0
  %244 = vmatpush1.msra.mxu0 0.0
  %245 = vmatprep.subr.mxu0 0.0
  %246 = vmatpush1.msra.mxu0 0.0
  %247 = vmatprep.subr.mxu0 0.0
  %248 = vmatpush1.msra.mxu0 0.0
  %249 = vmatprep.subr.mxu0 0.0
  %250 = vmatpush1.msra.mxu0 0.0
  %251 = vmatprep.subr.mxu0 0.0
  %252 = vmatpush1.msra.mxu0 0.0
  %253 = vmatprep.subr.mxu0 0.0
  %254 = vmatpush1.msra.mxu0 0.0
  %255 = vmatprep.subr.mxu0 0.0
  %256 = vmatpush1.msra.mxu0 0.0
  %257 = vmatprep.subr.mxu0 0.0
  %258 = vmatpush1.msra.mxu0 0.0
  %259 = vmatprep.subr.mxu0 0.0
  %260 = vmatpush1.msra.mxu0 0.0
  %261 = vmatprep.subr.mxu0 0.0
  %262 = vmatpush1.msra.mxu0 0.0
  %263 = vmatprep.subr.mxu0 0.0
  %264 = vmatpush1.msra.mxu0 0.0
  %265 = vmatprep.subr.mxu0 0.0
  %266 = vmatpush1.msra.mxu0 0.0
  %267 = vmatprep.subr.mxu0 0.0
  %268 = vmatpush1.msra.mxu0 0.0
  %269 = vmatprep.subr.mxu0 0.0
  %270 = vmatpush1.msra.mxu0 0.0
  %271 = vmatprep.subr.mxu0 0.0
  %272 = vmatpush1.msra.mxu0 0.0
  %273 = vmatprep.subr.mxu0 0.0
  %274 = vmatpush1.msra.mxu0 0.0
  %275 = vmatprep.subr.mxu0 0.0
  %276 = vmatpush1.msra.mxu0 0.0
  %277 = vmatprep.subr.mxu0 0.0
  %278 = vmatpush1.msra.mxu0 0.0
  %279 = vmatprep.subr.mxu0 0.0
  %280 = vmatpush1.msra.mxu0 0.0
  %281 = vmatprep.subr.mxu0 0.0
  %282 = vmatpush1.msra.mxu0 0.0
  %283 = vmatprep.mubr.f32.mxu0 0.0
  %284 = vmatmul.mubr.f32.gmra.mrb[0].mxu0 %v120
  %v285 = vpop.f32.mrb[0].mxu0
  %v286 = vadd.f32 0.0, %v285
  %v287 = vpop.f32.mrb[0].mxu0
  %288 = vmatprep.mubr.f32.mxu0 0.0
  %289 = vmatmul.mubr.f32.gmra.mrb[0].mxu0 %v123
  %v290 = vpop.f32.mrb[0].mxu0
  %v291 = vadd.f32 0.0, %v290
  %v292 = vpop.f32.mrb[0].mxu0
  %293 = vmatprep.mubr.f32.mxu0 0.0
  %294 = vmatmul.mubr.f32.gmra.mrb[0].mxu0 %v126
  %v295 = vpop.f32.mrb[0].mxu0
  %v296 = vadd.f32 0.0, %v295
  %v297 = vpop.f32.mrb[0].mxu0
  %298 = vmatprep.mubr.f32.mxu0 0.0
  %299 = vmatmul.mubr.f32.gmra.mrb[0].mxu0 %v129
  %v300 = vpop.f32.mrb[0].mxu0
  %v301 = vadd.f32 0.0, %v300
  %v302 = vpop.f32.mrb[0].mxu0
  %303 = vmatprep.mubr.f32.mxu0 0.0
  %304 = vmatmul.mubr.f32.gmra.mrb[0].mxu0 %v132
  %v305 = vpop.f32.mrb[0].mxu0
  %v306 = vadd.f32 0.0, %v305
  %v307 = vpop.f32.mrb[0].mxu0
  %308 = vmatprep.mubr.f32.mxu0 0.0
  %309 = vmatmul.mubr.f32.gmra.mrb[0].mxu0 %v135
  %v310 = vpop.f32.mrb[0].mxu0
  %v311 = vadd.f32 0.0, %v310
  %v312 = vpop.f32.mrb[0].mxu0
  %313 = vmatprep.mubr.f32.mxu0 0.0
  %314 = vmatmul.mubr.f32.gmra.mrb[0].mxu0 %v138
  %v315 = vpop.f32.mrb[0].mxu0
  %v316 = vadd.f32 0.0, %v315
  %v317 = vpop.f32.mrb[0].mxu0
  %318 = vmatprep.mubr.f32.mxu0 0.0
  %319 = vmatmul.mubr.f32.gmra.mrb[0].mxu0 %v141
  %v320 = vpop.f32.mrb[0].mxu0
  %v321 = vadd.f32 0.0, %v320
  %v322 = vpop.f32.mrb[0].mxu0
  %323 = vmatprep.mubr.f32.mxu0 0.0
  %324 = vmatmul.mubr.f32.gmra.mrb[0].mxu0 %v144
  %v325 = vpop.f32.mrb[0].mxu0
  %v326 = vadd.f32 0.0, %v325
  %v327 = vpop.f32.mrb[0].mxu0
  %328 = vmatprep.mubr.f32.mxu0 0.0
  %329 = vmatmul.mubr.f32.gmra.mrb[0].mxu0 %v147
  %v330 = vpop.f32.mrb[0].mxu0
  %v331 = vadd.f32 0.0, %v330
  %v332 = vpop.f32.mrb[0].mxu0
  %333 = vmatprep.mubr.f32.mxu0 0.0
  %334 = vmatmul.mubr.f32.gmra.mrb[0].mxu0 %v150
  %v335 = vpop.f32.mrb[0].mxu0
  %v336 = vadd.f32 0.0, %v335
  %v337 = vpop.f32.mrb[0].mxu0
  %338 = vmatprep.mubr.f32.mxu0 0.0
  %339 = vmatmul.mubr.f32.gmra.mrb[0].mxu0 %v153
  %v340 = vpop.f32.mrb[0].mxu0
  %v341 = vadd.f32 0.0, %v340
  %v342 = vpop.f32.mrb[0].mxu0
  %343 = vmatprep.mubr.f32.mxu0 0.0
  %344 = vmatmul.mubr.f32.gmra.mrb[0].mxu0 %v156
  %v345 = vpop.f32.mrb[0].mxu0
  %v346 = vadd.f32 0.0, %v345
  %v347 = vpop.f32.mrb[0].mxu0
  %348 = vmatprep.mubr.f32.mxu0 0.0
  %349 = vmatmul.mubr.f32.gmra.mrb[0].mxu0 %v159
  %v350 = vpop.f32.mrb[0].mxu0
  %v351 = vadd.f32 0.0, %v350
  %v352 = vpop.f32.mrb[0].mxu0
  %353 = vmatprep.mubr.f32.mxu0 0.0
  %354 = vmatmul.mubr.f32.gmra.mrb[0].mxu0 %v162
  %v355 = vpop.f32.mrb[0].mxu0
  %v356 = vadd.f32 0.0, %v355
  %v357 = vpop.f32.mrb[0].mxu0
  %358 = vmatprep.mubr.f32.mxu0 0.0
  %359 = vmatmul.mubr.f32.gmra.mrb[0].mxu0 %v165
  %v360 = vpop.f32.mrb[0].mxu0
  %v361 = vadd.f32 0.0, %v360
  %v362 = vpop.f32.mrb[0].mxu0
  %363 = vmatprep.mubr.f32.mxu0 0.0
  %364 = vmatmul.mubr.f32.gmra.mrb[0].mxu0 %v168
  %v365 = vpop.f32.mrb[0].mxu0
  %v366 = vadd.f32 0.0, %v365
  %v367 = vpop.f32.mrb[0].mxu0
  %368 = vmatprep.mubr.f32.mxu0 0.0
  %369 = vmatmul.mubr.f32.gmra.mrb[0].mxu0 %v171
  %v370 = vpop.f32.mrb[0].mxu0
  %v371 = vadd.f32 0.0, %v370
  %v372 = vpop.f32.mrb[0].mxu0
  %373 = vmatprep.mubr.f32.mxu0 0.0
  %374 = vmatmul.mubr.f32.gmra.mrb[0].mxu0 %v174
  %v375 = vpop.f32.mrb[0].mxu0
  %v376 = vadd.f32 0.0, %v375
  %v377 = vpop.f32.mrb[0].mxu0
  %378 = vmatprep.mubr.f32.mxu0 0.0
  %379 = vmatmul.mubr.f32.gmra.mrb[0].mxu0 %v177
  %v380 = vpop.f32.mrb[0].mxu0
  %v381 = vadd.f32 0.0, %v380
  %v382 = vpop.f32.mrb[0].mxu0
  %383 = vmatprep.mubr.f32.mxu0 0.0
  %384 = vmatmul.mubr.f32.gmra.mrb[0].mxu0 %v180
  %v385 = vpop.f32.mrb[0].mxu0
  %v386 = vadd.f32 0.0, %v385
  %v387 = vpop.f32.mrb[0].mxu0
  %388 = vmatprep.mubr.f32.mxu0 0.0
  %389 = vmatmul.mubr.f32.gmra.mrb[0].mxu0 %v183
  %v390 = vpop.f32.mrb[0].mxu0
  %v391 = vadd.f32 0.0, %v390
  %v392 = vpop.f32.mrb[0].mxu0
  %393 = vmatprep.mubr.f32.mxu0 0.0
  %394 = vmatmul.mubr.f32.gmra.mrb[0].mxu0 %v186
  %v395 = vpop.f32.mrb[0].mxu0
  %v396 = vadd.f32 0.0, %v395
  %v397 = vpop.f32.mrb[0].mxu0
  %398 = vmatprep.mubr.f32.mxu0 0.0
  %399 = vmatmul.mubr.f32.gmra.mrb[0].mxu0 %v189
  %v400 = vpop.f32.mrb[0].mxu0
  %v401 = vadd.f32 0.0, %v400
  %v402 = vpop.f32.mrb[0].mxu0
  %403 = vmatprep.mubr.f32.mxu0 0.0
  %404 = vmatmul.mubr.f32.gmra.mrb[0].mxu0 %v192
  %v405 = vpop.f32.mrb[0].mxu0
  %v406 = vadd.f32 0.0, %v405
  %v407 = vpop.f32.mrb[0].mxu0
  %408 = vmatprep.mubr.f32.mxu0 0.0
  %409 = vmatmul.mubr.f32.gmra.mrb[0].mxu0 %v195
  %v410 = vpop.f32.mrb[0].mxu0
  %v411 = vadd.f32 0.0, %v410
  %v412 = vpop.f32.mrb[0].mxu0
  %413 = vmatprep.mubr.f32.mxu0 0.0
  %414 = vmatmul.mubr.f32.gmra.mrb[0].mxu0 %v198
  %v415 = vpop.f32.mrb[0].mxu0
  %v416 = vadd.f32 0.0, %v415
  %v417 = vpop.f32.mrb[0].mxu0
  %418 = vmatprep.mubr.f32.mxu0 0.0
  %419 = vmatmul.mubr.f32.gmra.mrb[0].mxu0 %v201
  %v420 = vpop.f32.mrb[0].mxu0
  %v421 = vadd.f32 0.0, %v420
  %v422 = vpop.f32.mrb[0].mxu0
  %423 = vmatprep.mubr.f32.mxu0 0.0
  %424 = vmatmul.mubr.f32.gmra.mrb[0].mxu0 %v204
  %v425 = vpop.f32.mrb[0].mxu0
  %v426 = vadd.f32 0.0, %v425
  %v427 = vpop.f32.mrb[0].mxu0
  %428 = vmatprep.mubr.f32.mxu0 0.0
  %429 = vmatmul.mubr.f32.gmra.mrb[0].mxu0 %v207
  %v430 = vpop.f32.mrb[0].mxu0
  %v431 = vadd.f32 0.0, %v430
  %v432 = vpop.f32.mrb[0].mxu0
  %433 = vmatprep.mubr.f32.mxu0 0.0
  %434 = vmatmul.mubr.f32.gmra.mrb[0].mxu0 %v210
  %v435 = vpop.f32.mrb[0].mxu0
  %v436 = vadd.f32 0.0, %v435
  %v437 = vpop.f32.mrb[0].mxu0
  %438 = vmatprep.mubr.f32.mxu0 0.0
  %439 = vmatmul.mubr.f32.gmra.mrb[0].mxu0 %v213
  %v440 = vpop.f32.mrb[0].mxu0
  %v441 = vadd.f32 0.0, %v440
  %v442 = vpop.f32.mrb[0].mxu0
  %443 = vdwg.mxu0
  %v444 = vadd.f32 %v51, %v286
  %v445 = vadd.f32 %v52, %v291
  %v446 = vadd.f32 %v53, %v296
  %v447 = vadd.f32 %v54, %v301
  %v448 = vadd.f32 %v55, %v306
  %v449 = vadd.f32 %v56, %v311
  %v450 = vadd.f32 %v57, %v316
  %v451 = vadd.f32 %v58, %v321
  %v452 = vadd.f32 %v59, %v326
  %v453 = vadd.f32 %v60, %v331
  %v454 = vadd.f32 %v61, %v336
  %v455 = vadd.f32 %v62, %v341
  %v456 = vadd.f32 %v63, %v346
  %v457 = vadd.f32 %v64, %v351
  %v458 = vadd.f32 %v65, %v356
  %v459 = vadd.f32 %v66, %v361
  %v460 = vadd.f32 %v67, %v366
  %v461 = vadd.f32 %v68, %v371
  %v462 = vadd.f32 %v69, %v376
  %v463 = vadd.f32 %v70, %v381
  %v464 = vadd.f32 %v71, %v386
  %v465 = vadd.f32 %v72, %v391
  %v466 = vadd.f32 %v73, %v396
  %v467 = vadd.f32 %v74, %v401
  %v468 = vadd.f32 %v75, %v406
  %v469 = vadd.f32 %v76, %v411
  %v470 = vadd.f32 %v77, %v416
  %v471 = vadd.f32 %v78, %v421
  %v472 = vadd.f32 %v79, %v426
  %v473 = vadd.f32 %v80, %v431
  %v474 = vadd.f32 %v81, %v436
  %v475 = vadd.f32 %v82, %v441
  %vm476 = vcmask 31744
  %477 = vst.msk [vmem:[#allocation2] sm:$0xff] %vm476, %v444
  %478 = vst.msk [vmem:[#allocation2 + $0x8] sm:$0xff] %vm476, %v445
  %479 = vst.msk [vmem:[#allocation2 + $0x10] sm:$0xff] %vm476, %v446
  %480 = vst.msk [vmem:[#allocation2 + $0x18] sm:$0xff] %vm476, %v447
  %481 = vst.msk [vmem:[#allocation2 + $0x20] sm:$0xff] %vm476, %v448
  %482 = vst.msk [vmem:[#allocation2 + $0x28] sm:$0xff] %vm476, %v449
  %483 = vst.msk [vmem:[#allocation2 + $0x30] sm:$0xff] %vm476, %v450
  %484 = vst.msk [vmem:[#allocation2 + $0x38] sm:$0xff] %vm476, %v451
  %485 = vst.msk [vmem:[#allocation2 + $0x40] sm:$0xff] %vm476, %v452
  %486 = vst.msk [vmem:[#allocation2 + $0x48] sm:$0xff] %vm476, %v453
  %487 = vst.msk [vmem:[#allocation2 + $0x50] sm:$0xff] %vm476, %v454
  %488 = vst.msk [vmem:[#allocation2 + $0x58] sm:$0xff] %vm476, %v455
  %489 = vst.msk [vmem:[#allocation2 + $0x60] sm:$0xff] %vm476, %v456
  %490 = vst.msk [vmem:[#allocation2 + $0x68] sm:$0xff] %vm476, %v457
  %491 = vst.msk [vmem:[#allocation2 + $0x70] sm:$0xff] %vm476, %v458
  %492 = vst.msk [vmem:[#allocation2 + $0x78] sm:$0xff] %vm476, %v459
  %493 = vst.msk [vmem:[#allocation2 + $0x80] sm:$0xff] %vm476, %v460
  %494 = vst.msk [vmem:[#allocation2 + $0x88] sm:$0xff] %vm476, %v461
  %495 = vst.msk [vmem:[#allocation2 + $0x90] sm:$0xff] %vm476, %v462
  %496 = vst.msk [vmem:[#allocation2 + $0x98] sm:$0xff] %vm476, %v463
  %497 = vst.msk [vmem:[#allocation2 + $0xa0] sm:$0xff] %vm476, %v464
  %498 = vst.msk [vmem:[#allocation2 + $0xa8] sm:$0xff] %vm476, %v465
  %499 = vst.msk [vmem:[#allocation2 + $0xb0] sm:$0xff] %vm476, %v466
  %500 = vst.msk [vmem:[#allocation2 + $0xb8] sm:$0xff] %vm476, %v467
  %501 = vst.msk [vmem:[#allocation2 + $0xc0] sm:$0xff] %vm476, %v468
  %502 = vst.msk [vmem:[#allocation2 + $0xc8] sm:$0xff] %vm476, %v469
  %503 = vst.msk [vmem:[#allocation2 + $0xd0] sm:$0xff] %vm476, %v470
  %504 = vst.msk [vmem:[#allocation2 + $0xd8] sm:$0xff] %vm476, %v471
  %505 = vst.msk [vmem:[#allocation2 + $0xe0] sm:$0xff] %vm476, %v472
  %506 = vst.msk [vmem:[#allocation2 + $0xe8] sm:$0xff] %vm476, %v473
  %507 = vst.msk [vmem:[#allocation2 + $0xf0] sm:$0xff] %vm476, %v474
  %508 = vst.msk [vmem:[#allocation2 + $0xf8] sm:$0xff] %vm476, %v475
  // Predicated region
  $region18: #{tpu_custom_call.1} parent=0 // pred_check
    %p509 = pneg %p14
  $region19: #{tpu_custom_call.1} parent=0 // pred_check_branch
    %511 = sbr.rel (%p509) target = $region21
  $region20: #{tpu_custom_call.1} parent=0 // pred_region
    %v512 = vld [vmem:[#allocation2] sm:$0xff]
    %v513 = vld [vmem:[#allocation2 + $0x8] sm:$0xff]
    %v514 = vld [vmem:[#allocation2 + $0x10] sm:$0xff]
    %v515 = vld [vmem:[#allocation2 + $0x18] sm:$0xff]
    %v516 = vld [vmem:[#allocation2 + $0x20] sm:$0xff]
    %v517 = vld [vmem:[#allocation2 + $0x28] sm:$0xff]
    %v518 = vld [vmem:[#allocation2 + $0x30] sm:$0xff]
    %v519 = vld [vmem:[#allocation2 + $0x38] sm:$0xff]
    %v520 = vld [vmem:[#allocation2 + $0x40] sm:$0xff]
    %v521 = vld [vmem:[#allocation2 + $0x48] sm:$0xff]
    %v522 = vld [vmem:[#allocation2 + $0x50] sm:$0xff]
    %v523 = vld [vmem:[#allocation2 + $0x58] sm:$0xff]
    %v524 = vld [vmem:[#allocation2 + $0x60] sm:$0xff]
    %v525 = vld [vmem:[#allocation2 + $0x68] sm:$0xff]
    %v526 = vld [vmem:[#allocation2 + $0x70] sm:$0xff]
    %v527 = vld [vmem:[#allocation2 + $0x78] sm:$0xff]
    %v528 = vld [vmem:[#allocation2 + $0x80] sm:$0xff]
    %v529 = vld [vmem:[#allocation2 + $0x88] sm:$0xff]
    %v530 = vld [vmem:[#allocation2 + $0x90] sm:$0xff]
    %v531 = vld [vmem:[#allocation2 + $0x98] sm:$0xff]
    %v532 = vld [vmem:[#allocation2 + $0xa0] sm:$0xff]
    %v533 = vld [vmem:[#allocation2 + $0xa8] sm:$0xff]
    %v534 = vld [vmem:[#allocation2 + $0xb0] sm:$0xff]
    %v535 = vld [vmem:[#allocation2 + $0xb8] sm:$0xff]
    %v536 = vld [vmem:[#allocation2 + $0xc0] sm:$0xff]
    %v537 = vld [vmem:[#allocation2 + $0xc8] sm:$0xff]
    %v538 = vld [vmem:[#allocation2 + $0xd0] sm:$0xff]
    %v539 = vld [vmem:[#allocation2 + $0xd8] sm:$0xff]
    %v540 = vld [vmem:[#allocation2 + $0xe0] sm:$0xff]
    %v541 = vld [vmem:[#allocation2 + $0xe8] sm:$0xff]
    %v542 = vld [vmem:[#allocation2 + $0xf0] sm:$0xff]
    %v543 = vld [vmem:[#allocation2 + $0xf8] sm:$0xff]
    %v544 = vld [vmem:[%s2] sm:$0x1]
    %v546 = vlaneseq
    %v547 = vshrl.u32 %v546, 7
    %v548 = vsub.s32 0, %v547
    %v549 = vrot.slane %v544, %v548
    %v551 = vadd.f32 %v512, %v549
    %v552 = vadd.f32 %v513, %v549
    %v553 = vadd.f32 %v514, %v549
    %v554 = vadd.f32 %v515, %v549
    %v555 = vadd.f32 %v516, %v549
    %v556 = vadd.f32 %v517, %v549
    %v557 = vadd.f32 %v518, %v549
    %v558 = vadd.f32 %v519, %v549
    %v559 = vadd.f32 %v520, %v549
    %v560 = vadd.f32 %v521, %v549
    %v561 = vadd.f32 %v522, %v549
    %v562 = vadd.f32 %v523, %v549
    %v563 = vadd.f32 %v524, %v549
    %v564 = vadd.f32 %v525, %v549
    %v565 = vadd.f32 %v526, %v549
    %v566 = vadd.f32 %v527, %v549
    %v567 = vadd.f32 %v528, %v549
    %v568 = vadd.f32 %v529, %v549
    %v569 = vadd.f32 %v530, %v549
    %v570 = vadd.f32 %v531, %v549
    %v571 = vadd.f32 %v532, %v549
    %v572 = vadd.f32 %v533, %v549
    %v573 = vadd.f32 %v534, %v549
    %v574 = vadd.f32 %v535, %v549
    %v575 = vadd.f32 %v536, %v549
    %v576 = vadd.f32 %v537, %v549
    %v577 = vadd.f32 %v538, %v549
    %v578 = vadd.f32 %v539, %v549
    %v579 = vadd.f32 %v540, %v549
    %v580 = vadd.f32 %v541, %v549
    %v581 = vadd.f32 %v542, %v549
    %v582 = vadd.f32 %v543, %v549
    %vm583 = vcmp.ge.f32.partialorder %v551, 0.0
    %vm584 = vcmp.ge.f32.partialorder %v552, 0.0
    %vm585 = vcmp.ge.f32.partialorder %v553, 0.0
    %vm586 = vcmp.ge.f32.partialorder %v554, 0.0
    %vm587 = vcmp.ge.f32.partialorder %v555, 0.0
    %vm588 = vcmp.ge.f32.partialorder %v556, 0.0
    %vm589 = vcmp.ge.f32.partialorder %v557, 0.0
    %vm590 = vcmp.ge.f32.partialorder %v558, 0.0
    %vm591 = vcmp.ge.f32.partialorder %v559, 0.0
    %vm592 = vcmp.ge.f32.partialorder %v560, 0.0
    %vm593 = vcmp.ge.f32.partialorder %v561, 0.0
    %vm594 = vcmp.ge.f32.partialorder %v562, 0.0
    %vm595 = vcmp.ge.f32.partialorder %v563, 0.0
    %vm596 = vcmp.ge.f32.partialorder %v564, 0.0
    %vm597 = vcmp.ge.f32.partialorder %v565, 0.0
    %vm598 = vcmp.ge.f32.partialorder %v566, 0.0
    %vm599 = vcmp.ge.f32.partialorder %v567, 0.0
    %vm600 = vcmp.ge.f32.partialorder %v568, 0.0
    %vm601 = vcmp.ge.f32.partialorder %v569, 0.0
    %vm602 = vcmp.ge.f32.partialorder %v570, 0.0
    %vm603 = vcmp.ge.f32.partialorder %v571, 0.0
    %vm604 = vcmp.ge.f32.partialorder %v572, 0.0
    %vm605 = vcmp.ge.f32.partialorder %v573, 0.0
    %vm606 = vcmp.ge.f32.partialorder %v574, 0.0
    %vm607 = vcmp.ge.f32.partialorder %v575, 0.0
    %vm608 = vcmp.ge.f32.partialorder %v576, 0.0
    %vm609 = vcmp.ge.f32.partialorder %v577, 0.0
    %vm610 = vcmp.ge.f32.partialorder %v578, 0.0
    %vm611 = vcmp.ge.f32.partialorder %v579, 0.0
    %vm612 = vcmp.ge.f32.partialorder %v580, 0.0
    %vm613 = vcmp.ge.f32.partialorder %v581, 0.0
    %vm614 = vcmp.ge.f32.partialorder %v582, 0.0
    %v615 = vmul.f32 %v551, 0.2
    %v616 = vmul.f32 %v552, 0.2
    %v617 = vmul.f32 %v553, 0.2
    %v618 = vmul.f32 %v554, 0.2
    %v619 = vmul.f32 %v555, 0.2
    %v620 = vmul.f32 %v556, 0.2
    %v621 = vmul.f32 %v557, 0.2
    %v622 = vmul.f32 %v558, 0.2
    %v623 = vmul.f32 %v559, 0.2
    %v624 = vmul.f32 %v560, 0.2
    %v625 = vmul.f32 %v561, 0.2
    %v626 = vmul.f32 %v562, 0.2
    %v627 = vmul.f32 %v563, 0.2
    %v628 = vmul.f32 %v564, 0.2
    %v629 = vmul.f32 %v565, 0.2
    %v630 = vmul.f32 %v566, 0.2
    %v631 = vmul.f32 %v567, 0.2
    %v632 = vmul.f32 %v568, 0.2
    %v633 = vmul.f32 %v569, 0.2
    %v634 = vmul.f32 %v570, 0.2
    %v635 = vmul.f32 %v571, 0.2
    %v636 = vmul.f32 %v572, 0.2
    %v637 = vmul.f32 %v573, 0.2
    %v638 = vmul.f32 %v574, 0.2
    %v639 = vmul.f32 %v575, 0.2
    %v640 = vmul.f32 %v576, 0.2
    %v641 = vmul.f32 %v577, 0.2
    %v642 = vmul.f32 %v578, 0.2
    %v643 = vmul.f32 %v579, 0.2
    %v644 = vmul.f32 %v580, 0.2
    %v645 = vmul.f32 %v581, 0.2
    %v646 = vmul.f32 %v582, 0.2
    %v647 = vsel %vm583, %v551, %v615
    %v648 = vsel %vm584, %v552, %v616
    %v649 = vsel %vm585, %v553, %v617
    %v650 = vsel %vm586, %v554, %v618
    %v651 = vsel %vm587, %v555, %v619
    %v652 = vsel %vm588, %v556, %v620
    %v653 = vsel %vm589, %v557, %v621
    %v654 = vsel %vm590, %v558, %v622
    %v655 = vsel %vm591, %v559, %v623
    %v656 = vsel %vm592, %v560, %v624
    %v657 = vsel %vm593, %v561, %v625
    %v658 = vsel %vm594, %v562, %v626
    %v659 = vsel %vm595, %v563, %v627
    %v660 = vsel %vm596, %v564, %v628
    %v661 = vsel %vm597, %v565, %v629
    %v662 = vsel %vm598, %v566, %v630
    %v663 = vsel %vm599, %v567, %v631
    %v664 = vsel %vm600, %v568, %v632
    %v665 = vsel %vm601, %v569, %v633
    %v666 = vsel %vm602, %v570, %v634
    %v667 = vsel %vm603, %v571, %v635
    %v668 = vsel %vm604, %v572, %v636
    %v669 = vsel %vm605, %v573, %v637
    %v670 = vsel %vm606, %v574, %v638
    %v671 = vsel %vm607, %v575, %v639
    %v672 = vsel %vm608, %v576, %v640
    %v673 = vsel %vm609, %v577, %v641
    %v674 = vsel %vm610, %v578, %v642
    %v675 = vsel %vm611, %v579, %v643
    %v676 = vsel %vm612, %v580, %v644
    %v677 = vsel %vm613, %v581, %v645
    %v678 = vsel %vm614, %v582, %v646
    %679 = vst.msk [vmem:[%s3] sm:$0xff] %vm476, %v647
    %680 = vst.msk [vmem:[%s3 + $0x8] sm:$0xff] %vm476, %v648
    %681 = vst.msk [vmem:[%s3 + $0x10] sm:$0xff] %vm476, %v649
    %682 = vst.msk [vmem:[%s3 + $0x18] sm:$0xff] %vm476, %v650
    %683 = vst.msk [vmem:[%s3 + $0x20] sm:$0xff] %vm476, %v651
    %684 = vst.msk [vmem:[%s3 + $0x28] sm:$0xff] %vm476, %v652
    %685 = vst.msk [vmem:[%s3 + $0x30] sm:$0xff] %vm476, %v653
    %686 = vst.msk [vmem:[%s3 + $0x38] sm:$0xff] %vm476, %v654
    %687 = vst.msk [vmem:[%s3 + $0x40] sm:$0xff] %vm476, %v655
    %688 = vst.msk [vmem:[%s3 + $0x48] sm:$0xff] %vm476, %v656
    %689 = vst.msk [vmem:[%s3 + $0x50] sm:$0xff] %vm476, %v657
    %690 = vst.msk [vmem:[%s3 + $0x58] sm:$0xff] %vm476, %v658
    %691 = vst.msk [vmem:[%s3 + $0x60] sm:$0xff] %vm476, %v659
    %692 = vst.msk [vmem:[%s3 + $0x68] sm:$0xff] %vm476, %v660
    %693 = vst.msk [vmem:[%s3 + $0x70] sm:$0xff] %vm476, %v661
    %694 = vst.msk [vmem:[%s3 + $0x78] sm:$0xff] %vm476, %v662
    %695 = vst.msk [vmem:[%s3 + $0x80] sm:$0xff] %vm476, %v663
    %696 = vst.msk [vmem:[%s3 + $0x88] sm:$0xff] %vm476, %v664
    %697 = vst.msk [vmem:[%s3 + $0x90] sm:$0xff] %vm476, %v665
    %698 = vst.msk [vmem:[%s3 + $0x98] sm:$0xff] %vm476, %v666
    %699 = vst.msk [vmem:[%s3 + $0xa0] sm:$0xff] %vm476, %v667
    %700 = vst.msk [vmem:[%s3 + $0xa8] sm:$0xff] %vm476, %v668
    %701 = vst.msk [vmem:[%s3 + $0xb0] sm:$0xff] %vm476, %v669
    %702 = vst.msk [vmem:[%s3 + $0xb8] sm:$0xff] %vm476, %v670
    %703 = vst.msk [vmem:[%s3 + $0xc0] sm:$0xff] %vm476, %v671
    %704 = vst.msk [vmem:[%s3 + $0xc8] sm:$0xff] %vm476, %v672
    %705 = vst.msk [vmem:[%s3 + $0xd0] sm:$0xff] %vm476, %v673
    %706 = vst.msk [vmem:[%s3 + $0xd8] sm:$0xff] %vm476, %v674
    %707 = vst.msk [vmem:[%s3 + $0xe0] sm:$0xff] %vm476, %v675
    %708 = vst.msk [vmem:[%s3 + $0xe8] sm:$0xff] %vm476, %v676
    %709 = vst.msk [vmem:[%s3 + $0xf0] sm:$0xff] %vm476, %v677
    %710 = vst.msk [vmem:[%s3 + $0xf8] sm:$0xff] %vm476, %v678
  $region21: #{tpu_custom_call.1} parent=0 // pred_fallthru
    _
  // Predicated region
  $region22: #{tpu_custom_call.1} parent=0 // pred_check
    _
  $region23: #{tpu_custom_call.1} parent=0 // pred_check_branch
    %712 = sbr.rel (0) target = $region25
  $region24: #{tpu_custom_call.1} parent=0 // pred_region
    _
  $region25: #{tpu_custom_call.1} parent=0 // pred_fallthru
    _
  // Predicated region
  $region26: #{tpu_custom_call.1} parent=0 // pred_check
    _
  $region27: #{tpu_custom_call.1} parent=0 // pred_check_branch
    %714 = sbr.rel (0) target = $region29
  $region28: #{tpu_custom_call.1} parent=0 // pred_region
    _
  $region29: #{tpu_custom_call.1} parent=0 // pred_fallthru
    _

</llo_original>
